<compile_context>
chip_gen: v7x
topology: tpu7x:2x2x1
jax: 0.10.0
libtpu: 0.0.40
codegen_flags: <defaults>
</compile_context>

<pallas_src>
import functools

import jax
import jax.numpy as jnp
from jax import lax
from jax.experimental import pallas as pl
from jax.experimental.pallas import tpu as pltpu


def _choose_tile_m(batch, row_bytes):
    """Batch-tile rows per grid step (always a multiple of 8)."""
    # Target a multi-MiB input tile but keep the double-buffered pipeline well
    # inside every generation's scoped VMEM (v5e default 16 MiB): <= ~6 MiB/buffer.
    per_buffer_budget = 6 * 1024 * 1024
    tm = (per_buffer_budget // max(row_bytes, 1)) // 8 * 8
    tm = max(8, min(1024, tm))
    # Keep >= 2 grid steps once batch >= 16 so the "parallel" batch axis can be
    # sharded across v7x's two TensorCores (no effect on single-TC v5e/v6e).
    if batch >= 16:
        tm = min(tm, 8 * pl.cdiv(batch, 16))
    # Never bigger than the (8-rounded) batch itself.
    tm = min(tm, 8 * pl.cdiv(batch, 8))
    return max(8, tm)


def _ce_ls_kernel(x_ref, t_ref, loss_ref, *, batch, tile_m, keep_w, unif_w):
    i = pl.program_id(0)
    x = x_ref[...].astype(jnp.float32)          # (TM, K); cast in-kernel (bf16 DMA ok)
    tgt = t_ref[...]                            # (TM, 1) int32

    # Numerically stable log-sum-exp over the class (lane) dim.
    m = jnp.max(x, axis=1, keepdims=True)                    # (TM, 1)
    s = jnp.sum(jnp.exp(x - m), axis=1, keepdims=True)       # (TM, 1)
    lse = m + jnp.log(s)

    # Single weighted row reduction replaces one-hot / log-prob materialization:
    #   w_j = eps/K + (1 - eps) * [j == target],  sum_j w_j == 1
    #   => loss = lse - sum_j w_j * x_j
    lane = lax.broadcasted_iota(jnp.int32, x.shape, 1)
    w = jnp.where(lane == tgt, keep_w + unif_w, unif_w)
    wsum = jnp.sum(w * x, axis=1, keepdims=True)             # (TM, 1)
    loss = lse - wsum

    # Zero ragged-tail rows: their logits/targets are unspecified VMEM contents for
    # the clipped last block; the where() select keeps any garbage/NaN from escaping.
    row = i * tile_m + lax.broadcasted_iota(jnp.int32, (tile_m, 1), 0)
    loss_ref[...] = jnp.where(row < batch, loss, 0.0)


def cross_entropy_label_smooth(inputs, targets, num_classes, epsilon=0.1,
                               reduction=True):
    """Pallas TPU forward of CrossEntropyLabelSmooth.

    inputs:  (B, num_classes) float logits (any float dtype; cast to f32 in-kernel)
    targets: (B,) int class indices
    """
    B, K = inputs.shape
    assert K == num_classes

    itemsize = jnp.dtype(inputs.dtype).itemsize
    k_lanes = 128 * pl.cdiv(K, 128)              # physical lane width of one VMEM row
    TM = _choose_tile_m(B, k_lanes * itemsize)
    grid = (pl.cdiv(B, TM),)

    keep_w = float(1.0 - epsilon)
    unif_w = float(epsilon) / float(num_classes)

    t2 = targets.astype(jnp.int32).reshape(B, 1)

    # Double-buffered VMEM footprint (input + targets + output tiles) plus margin;
    # clamp into [16 MiB, 32 MiB] which is safe on v5e/v6e/v7x.
    vmem_need = 2 * (TM * k_lanes * itemsize + 2 * TM * 128 * 4) + (2 << 20)
    vmem_limit = int(min(max(vmem_need, 16 << 20), 32 << 20))

    kernel = functools.partial(_ce_ls_kernel, batch=B, tile_m=TM,
                               keep_w=keep_w, unif_w=unif_w)

    losses = pl.pallas_call(
        kernel,
        out_shape=jax.ShapeDtypeStruct((B, 1), jnp.float32),
        grid_spec=pltpu.PrefetchScalarGridSpec(
            num_scalar_prefetch=0,
            grid=grid,
            in_specs=[
                pl.BlockSpec((TM, K), lambda i: (i, 0)),   # full-extent class dim
                pl.BlockSpec((TM, 1), lambda i: (i, 0)),
            ],
            out_specs=pl.BlockSpec((TM, 1), lambda i: (i, 0)),
        ),
        compiler_params=pltpu.CompilerParams(
            dimension_semantics=("parallel",),
            vmem_limit_bytes=vmem_limit,
        ),
        cost_estimate=pl.CostEstimate(
            flops=6 * B * K,
            transcendentals=B * K + B,
            bytes_accessed=B * K * itemsize + B * 4 + B * 4,
        ),
    )(inputs, t2)

    per_sample = losses[:, 0]
    if reduction:
        return jnp.mean(per_sample)
    return per_sample


def _reference(inputs, targets, num_classes, epsilon=0.1, reduction=True):
    """Pure-JAX reference of CrossEntropyLabelSmooth.forward."""
    log_probs = jax.nn.log_softmax(inputs.astype(jnp.float32), axis=1)
    onehot = jax.nn.one_hot(targets, num_classes, dtype=jnp.float32)
    smoothed = (1.0 - epsilon) * onehot + epsilon / num_classes
    loss = jnp.sum(-smoothed * log_probs, axis=1)
    return jnp.mean(loss) if reduction else loss


if __name__ == "__main__":
    EPS = 0.1
    key = jax.random.PRNGKey(0)

    # Case 1: small aligned batch, f32 logits.
    B, NUM_CLASSES = 8, 10
    k_in, k_tg, key = jax.random.split(key, 3)
    inputs = jax.random.normal(k_in, (B, NUM_CLASSES), dtype=jnp.float32)
    targets = jax.random.randint(k_tg, (B,), 0, NUM_CLASSES, dtype=jnp.int32)

    loss = jax.block_until_ready(
        cross_entropy_label_smooth(inputs, targets, NUM_CLASSES, EPS))
    loss_vec = jax.block_until_ready(
        cross_entropy_label_smooth(inputs, targets, NUM_CLASSES, EPS,
                                   reduction=False))
    ref = _reference(inputs, targets, NUM_CLASSES, EPS)
    ref_vec = _reference(inputs, targets, NUM_CLASSES, EPS, reduction=False)
    assert loss.shape == () and loss_vec.shape == (B,)
    assert jnp.allclose(loss, ref, atol=1e-5, rtol=1e-5)
    assert jnp.allclose(loss_vec, ref_vec, atol=1e-5, rtol=1e-5)

    # Case 2: ragged batch (multi-step grid + clipped tail) with bf16 logits,
    # exercising the native-dtype DMA path and the in-kernel row mask.
    B2, NUM_CLASSES2 = 20, 10
    k_in2, k_tg2, key = jax.random.split(key, 3)
    inputs2 = jax.random.normal(k_in2, (B2, NUM_CLASSES2),
                                dtype=jnp.float32).astype(jnp.bfloat16)
    targets2 = jax.random.randint(k_tg2, (B2,), 0, NUM_CLASSES2, dtype=jnp.int32)

    loss2 = jax.block_until_ready(
        cross_entropy_label_smooth(inputs2, targets2, NUM_CLASSES2, EPS))
    ref2 = _reference(inputs2.astype(jnp.float32), targets2, NUM_CLASSES2, EPS)
    assert loss2.shape == ()
    assert jnp.allclose(loss2, ref2, atol=1e-2, rtol=1e-2)

    print("KERNEL_OK")
</pallas_src>

<mosaic_0001>
module attributes {stable_mosaic.version = 11 : i64} {
  func.func @_ce_ls_kernel(%arg0: i32, %arg1: memref<8x10xf32, #tpu.memory_space<vmem>>, %arg2: memref<8x1xi32, #tpu.memory_space<vmem>>, %arg3: memref<8x1xf32, #tpu.memory_space<vmem>>) attributes {dimension_semantics = [#tpu.dimension_semantics<parallel>], iteration_bounds = array<i64: 1>, scalar_prefetch = 0 : i64, scratch_operands = 0 : i64, tpu.core_type = #tpu.core_type<tc>, window_params = [{transform_indices = @transform_0, window_bounds = array<i64: 8, 10>}, {transform_indices = @transform_1, window_bounds = array<i64: 8, 1>}, {transform_indices = @transform_2, window_bounds = array<i64: 8, 1>}]} {
    %c0 = arith.constant 0 : index
    %c0_0 = arith.constant 0 : index
    %0 = vector.load %arg1[%c0, %c0_0] : memref<8x10xf32, #tpu.memory_space<vmem>>, vector<8x10xf32>
    %c0_1 = arith.constant 0 : index
    %c0_2 = arith.constant 0 : index
    %1 = vector.load %arg2[%c0_1, %c0_2] : memref<8x1xi32, #tpu.memory_space<vmem>>, vector<8x1xi32>
    %cst = arith.constant dense<0xFF800000> : vector<8xf32>
    %2 = vector.multi_reduction <maximumf>, %0, %cst [1] : vector<8x10xf32> to vector<8xf32>
    %3 = vector.shape_cast %2 : vector<8xf32> to vector<8x1xf32>
    %4 = vector.broadcast %3 : vector<8x1xf32> to vector<8x10xf32>
    %5 = arith.subf %0, %4 : vector<8x10xf32>
    %6 = math.exp %5 : vector<8x10xf32>
    %cst_3 = arith.constant dense<0.000000e+00> : vector<8xf32>
    %7 = vector.multi_reduction <add>, %6, %cst_3 [1] : vector<8x10xf32> to vector<8xf32>
    %8 = vector.shape_cast %7 : vector<8xf32> to vector<8x1xf32>
    %9 = math.log %8 : vector<8x1xf32>
    %10 = arith.addf %3, %9 : vector<8x1xf32>
    %11 = tpu.iota {dimensions = array<i32: 1>} : vector<8x10xi32>
    %12 = vector.broadcast %1 : vector<8x1xi32> to vector<8x10xi32>
    %13 = arith.cmpi eq, %11, %12 : vector<8x10xi32>
    %cst_4 = arith.constant 9.100000e-01 : f32
    %cst_5 = arith.constant 0.00999999977 : f32
    %14 = vector.broadcast %cst_4 : f32 to vector<8x10xf32>
    %15 = vector.broadcast %cst_5 : f32 to vector<8x10xf32>
    %16 = arith.select %13, %14, %15 : vector<8x10xi1>, vector<8x10xf32>
    %17 = arith.mulf %16, %0 : vector<8x10xf32>
    %cst_6 = arith.constant dense<0.000000e+00> : vector<8xf32>
    %18 = vector.multi_reduction <add>, %17, %cst_6 [1] : vector<8x10xf32> to vector<8xf32>
    %19 = vector.shape_cast %18 : vector<8xf32> to vector<8x1xf32>
    %20 = arith.subf %10, %19 : vector<8x1xf32>
    %c8_i32 = arith.constant 8 : i32
    %21 = arith.muli %arg0, %c8_i32 : i32
    %22 = tpu.iota {dimensions = array<i32: 0>} : vector<8x1xi32>
    %23 = vector.broadcast %21 : i32 to vector<8x1xi32>
    %24 = arith.addi %23, %22 : vector<8x1xi32>
    %c8_i32_7 = arith.constant 8 : i32
    %25 = vector.broadcast %c8_i32_7 : i32 to vector<8x1xi32>
    %26 = arith.cmpi slt, %24, %25 : vector<8x1xi32>
    %cst_8 = arith.constant 0.000000e+00 : f32
    %27 = vector.broadcast %cst_8 : f32 to vector<8x1xf32>
    %28 = arith.select %26, %20, %27 : vector<8x1xi1>, vector<8x1xf32>
    %c0_9 = arith.constant 0 : index
    %c0_10 = arith.constant 0 : index
    %29 = vector.load %arg3[%c0_9, %c0_10] : memref<8x1xf32, #tpu.memory_space<vmem>>, vector<8x1xf32>
    tpu.vector_store %arg3[%c0_9, %c0_10], %28 {strides = array<i32>} : memref<8x1xf32, #tpu.memory_space<vmem>>, vector<8x1xf32>,
    return
  }
  func.func @transform_0(%arg0: i32) -> (i32, i32) {
    %c0_i32 = arith.constant 0 : i32
    %c0_i32_0 = arith.constant 0 : i32
    return %arg0, %c0_i32 : i32, i32
  }
  func.func @transform_1(%arg0: i32) -> (i32, i32) {
    %c0_i32 = arith.constant 0 : i32
    %c0_i32_0 = arith.constant 0 : i32
    return %arg0, %c0_i32 : i32, i32
  }
  func.func @transform_2(%arg0: i32) -> (i32, i32) {
    %c0_i32 = arith.constant 0 : i32
    %c0_i32_0 = arith.constant 0 : i32
    return %arg0, %c0_i32 : i32, i32
  }
}

</mosaic_0001>

<llo_original>
// kernel: tpu_custom_call.1
$region0: #{tpu_custom_call.1}
  #allocation0 [shape = 'u32[]', space=smem, size = 0x4, offset = 0x4, fixed_abs, tag = 'smem constant byte address 0x4 - core index']
  #allocation1 [shape = 'u32[144,128]{1,0:T(1,128)}', space=vmem, size = 0x12000, scoped, tag = 'internal scratch']
  %s0 = inlined_call_operand.vmem [shape: f32[8,10], index: 0, kind: input, shape index: {}]
  %s1 = inlined_call_operand.vmem [shape: s32[8,1], index: 1, kind: input, shape index: {}]
  %s2 = inlined_call_operand.vmem [shape: f32[8,1], index: 2, kind: output, shape index: {}]
  %s3 = sld [smem:[#allocation0]]
  $region18: #{tpu_custom_call.1} parent=0
    _
  %s5 = ssub.s32 1, %s3
  %s6 = scalar_select 0, %s5, %s3
  // Predicated region
  $region2: #{tpu_custom_call.1} parent=0 // pred_check
    _
  $region3: #{tpu_custom_call.1} parent=0 // pred_check_branch
    %8 = sbr.rel (0) target = $region5
  $region4: #{tpu_custom_call.1} parent=0 // pred_region
    _
  $region5: #{tpu_custom_call.1} parent=0 // pred_fallthru
    _
  // Predicated region
  $region6: #{tpu_custom_call.1} parent=0 // pred_check
    _
  $region7: #{tpu_custom_call.1} parent=0 // pred_check_branch
    %10 = sbr.rel (0) target = $region9
  $region8: #{tpu_custom_call.1} parent=0 // pred_region
    _
  $region9: #{tpu_custom_call.1} parent=0 // pred_fallthru
    _
  %v11 = vld [vmem:[%s0] sm:$0xff]
  %v12 = vld [vmem:[%s1] sm:$0xff]
  %vm13 = vcmask 80896
  %v14 = vsel %vm13, %v11, -inf
  %15 = vmax.xlane.f32.xlu0 %v14
  %v16 = vpop.xlane.xlu0 %15
  %v17 = vsub.f32 %v11, %v16
  %v18 = vmul.f32 %v17, 1.442695
  %v19 = vpow.pop %v18
  %v20 = vsel %vm13, %v19, 0.0
  %21 = vadd.xlane.f32.xlu0 %v20
  %v22 = vpop.xlane.xlu0 %21
  %v23 = vlog2.pop %v22
  %v24 = vmul.f32 %v23, 0.6931472
  %v25 = vadd.f32 %v16, %v24
  %v26 = vlaneseq
  %v27 = vand.u32 %v26, 127
  %28 = vset.pattern.permute.xlu0 0
  %29 = vperm.xlu0 %28, %v12
  %v30 = vpop.permute.xlu0 %29
  %vm31 = vcmp.eq.s32.totalorder %v27, %v30
  %v32 = vsel %vm31, 0.91, 0.01
  %v33 = vmul.f32 %v32, %v11
  %v34 = vsel %vm13, %v33, 0.0
  %35 = vadd.xlane.f32.xlu0 %v34
  %v36 = vpop.xlane.xlu0 %35
  %v37 = vsub.f32 %v25, %v36
  %s38 = smul.u32 0, 8
  %v39 = vlaneseq
  %v40 = vshrl.u32 %v39, 7
  %v41 = vstv %s38
  %v42 = vadd.s32 %v41, %v40
  %vm43 = vcmp.lt.s32.totalorder %v42, 8
  %v44 = vsel %vm43, %v37, 0.0
  %vm45 = vcmask 7168
  %46 = vst.msk [vmem:[%s2] sm:$0xff] %vm45, %v44
  // Predicated region
  $region10: #{tpu_custom_call.1} parent=0 // pred_check
    _
  $region11: #{tpu_custom_call.1} parent=0 // pred_check_branch
    %48 = sbr.rel (0) target = $region13
  $region12: #{tpu_custom_call.1} parent=0 // pred_region
    _
  $region13: #{tpu_custom_call.1} parent=0 // pred_fallthru
    _
  // Predicated region
  $region14: #{tpu_custom_call.1} parent=0 // pred_check
    _
  $region15: #{tpu_custom_call.1} parent=0 // pred_check_branch
    %50 = sbr.rel (0) target = $region17
  $region16: #{tpu_custom_call.1} parent=0 // pred_region
    _
  $region17: #{tpu_custom_call.1} parent=0 // pred_fallthru
    _

</llo_original>
